<compile_context>
chip_gen: v7x
topology: tpu7x:2x2x1
jax: 0.10.0
libtpu: 0.0.40
codegen_flags: <defaults>
</compile_context>

<pallas_src>
import jax
import jax.numpy as jnp
from jax.experimental import pallas as pl
from jax.experimental.pallas import tpu as pltpu

HIDDEN = 64   # hidden_size
IN = 1        # input_size
OUT = 1       # output_size
LANE = 128    # TPU lane width


def rnn_classifier_kernel(x_ref, wih_ref, whh_ref, b_ref, wfc_ref, bfc_ref, o_ref):
    """One batch tile of the full recurrence + fc + sigmoid (batch on lanes).

    x_ref:   (T, TB)  time-major inputs for this batch tile (input_size==1 squeezed)
    wih_ref: (H, 1)   W_ih column (input_size == 1)
    whh_ref: (H, H)   W_hh (untransposed; column-layout recurrence uses W_hh @ h)
    b_ref:   (H, 1)   b_ih + b_hh column
    wfc_ref: (H, 1)   W_fc column (output_size == 1)
    bfc_ref: (1, 1)   fc bias
    o_ref:   (1, TB)  sigmoid(fc(h_T)), lane-dense across the batch tile
    """
    T, TB = x_ref.shape

    x = x_ref[...]                     # (T, TB)
    wih_col = wih_ref[...]             # (H, 1)
    whh = whh_ref[...]                 # (H, H)
    b_col = b_ref[...]                 # (H, 1)

    # Hoisted input projection + bias (input_size == 1 => outer product), computed
    # once before the serial loop:
    #   xw[t] = W_ih * x[t] + (b_ih + b_hh)          -> (T, H, TB)
    xw = x[:, None, :] * wih_col[None, :, :] + b_col[None, :, :]

    # Recurrence, fully unrolled (T static & small). h0 == 0 so step 0 has no matmul.
    h = jnp.tanh(xw[0])                                            # (H, TB)
    for t in range(1, T):
        h = jnp.tanh(
            jnp.dot(whh, h, preferred_element_type=jnp.float32) + xw[t])

    # fc head: O == 1 -> VPU multiply + sublane (XLU) reduction, lane-dense logits.
    logits = jnp.sum(h * wfc_ref[...], axis=0, keepdims=True) + bfc_ref[...]
    o_ref[...] = jax.nn.sigmoid(logits)                            # (1, TB)


def _round_up(n, m):
    return ((n + m - 1) // m) * m


@jax.jit
def rnn_classifier_forward(x, w_ih, w_hh, b_ih, b_hh, w_fc, b_fc):
    """x: (B, T, 1) float32, batch_first like PyTorch. Returns (B, 1) float32."""
    B, T, _ = x.shape
    H = w_hh.shape[0]

    # Time-major, lane-dense over batch: (T, B); size-1 feature dim squeezed.
    # (These prep ops fuse with the pallas_call under jit.)
    xt = x[..., 0].T.astype(jnp.float32)                   # (T, B)

    # Pad batch (lane dim) to a full 128-lane multiple: unmasked vector loads/stores
    # and one vreg-width batch tile per grid step.
    B_pad = _round_up(B, LANE)
    TB = LANE
    if B_pad != B:
        xt = jnp.pad(xt, ((0, 0), (0, B_pad - B)))

    wih_col = w_ih.reshape(H, 1).astype(jnp.float32)       # (H, 1)   (I == 1)
    whh = w_hh.astype(jnp.float32)                         # (H, H)   no transpose needed
    b_col = (b_ih + b_hh).reshape(H, 1).astype(jnp.float32)  # (H, 1)
    wfc_col = w_fc.reshape(H, 1).astype(jnp.float32)       # (H, 1)   (O == 1)
    bfc = b_fc.reshape(1, 1).astype(jnp.float32)           # (1, 1)

    grid = (B_pad // TB,)
    out = pl.pallas_call(
        rnn_classifier_kernel,
        out_shape=jax.ShapeDtypeStruct((1, B_pad), jnp.float32),
        grid_spec=pltpu.PrefetchScalarGridSpec(
            num_scalar_prefetch=0,
            grid=grid,
            in_specs=[
                pl.BlockSpec((T, TB), lambda i: (0, i)),   # per-tile batch slice of x
                pl.BlockSpec((H, 1), lambda i: (0, 0)),    # weights resident across grid
                pl.BlockSpec((H, H), lambda i: (0, 0)),
                pl.BlockSpec((H, 1), lambda i: (0, 0)),
                pl.BlockSpec((H, 1), lambda i: (0, 0)),
                pl.BlockSpec((1, 1), lambda i: (0, 0)),
            ],
            out_specs=pl.BlockSpec((1, TB), lambda i: (0, i)),  # lane-dense output row
        ),
        compiler_params=pltpu.CompilerParams(
            dimension_semantics=("parallel",)),            # v7x: split batch across 2 TCs
    )(xt, wih_col, whh, b_col, wfc_col, bfc)
    return out[0, :B].reshape(B, 1)


def rnn_classifier_reference(x, w_ih, w_hh, b_ih, b_hh, w_fc, b_fc):
    """Pure-JAX reference mirroring the PyTorch forward."""
    B = x.shape[0]
    h = jnp.zeros((B, HIDDEN), jnp.float32)

    def step(h, x_t):
        h_new = jnp.tanh(x_t @ w_ih.T + b_ih + h @ w_hh.T + b_hh)
        return h_new, None

    h_last, _ = jax.lax.scan(step, h, jnp.transpose(x, (1, 0, 2)))
    return jax.nn.sigmoid(h_last @ w_fc.T + b_fc)


if __name__ == "__main__":
    key = jax.random.PRNGKey(0)
    kx, k1, k2, k3, k4, k5, k6 = jax.random.split(key, 7)

    B, T = 2, 8
    x = jax.random.normal(kx, (B, T, IN), dtype=jnp.float32)

    # Deterministic parameter init (uniform(-1/sqrt(H), 1/sqrt(H)), like PyTorch).
    bound = 1.0 / jnp.sqrt(jnp.float32(HIDDEN))
    w_ih = jax.random.uniform(k1, (HIDDEN, IN), jnp.float32, -bound, bound)
    w_hh = jax.random.uniform(k2, (HIDDEN, HIDDEN), jnp.float32, -bound, bound)
    b_ih = jax.random.uniform(k3, (HIDDEN,), jnp.float32, -bound, bound)
    b_hh = jax.random.uniform(k4, (HIDDEN,), jnp.float32, -bound, bound)
    w_fc = jax.random.uniform(k5, (OUT, HIDDEN), jnp.float32, -bound, bound)
    b_fc = jax.random.uniform(k6, (OUT,), jnp.float32, -bound, bound)

    out = jax.block_until_ready(
        rnn_classifier_forward(x, w_ih, w_hh, b_ih, b_hh, w_fc, b_fc))
    ref = jax.block_until_ready(
        rnn_classifier_reference(x, w_ih, w_hh, b_ih, b_hh, w_fc, b_fc))

    assert out.shape == (B, OUT), out.shape
    assert jnp.allclose(out, ref, atol=1e-5, rtol=1e-5), (out, ref)
    print("KERNEL_OK")
</pallas_src>

<mosaic_0001>
module attributes {stable_mosaic.version = 11 : i64} {
  func.func @rnn_classifier_kernel(%arg0: i32, %arg1: memref<8x128xf32, #tpu.memory_space<vmem>>, %arg2: memref<64x1xf32, #tpu.memory_space<vmem>>, %arg3: memref<64x64xf32, #tpu.memory_space<vmem>>, %arg4: memref<64x1xf32, #tpu.memory_space<vmem>>, %arg5: memref<64x1xf32, #tpu.memory_space<vmem>>, %arg6: memref<1x1xf32, #tpu.memory_space<vmem>>, %arg7: memref<1x128xf32, #tpu.memory_space<vmem>>) attributes {dimension_semantics = [#tpu.dimension_semantics<parallel>], iteration_bounds = array<i64: 1>, scalar_prefetch = 0 : i64, scratch_operands = 0 : i64, tpu.core_type = #tpu.core_type<tc>, window_params = [{transform_indices = @transform_0, window_bounds = array<i64: 8, 128>}, {pipeline_mode = #tpu.pipeline_mode<synchronous>, transform_indices = @transform_1, window_bounds = array<i64: 64, 1>}, {pipeline_mode = #tpu.pipeline_mode<synchronous>, transform_indices = @transform_2, window_bounds = array<i64: 64, 64>}, {pipeline_mode = #tpu.pipeline_mode<synchronous>, transform_indices = @transform_3, window_bounds = array<i64: 64, 1>}, {pipeline_mode = #tpu.pipeline_mode<synchronous>, transform_indices = @transform_4, window_bounds = array<i64: 64, 1>}, {pipeline_mode = #tpu.pipeline_mode<synchronous>, transform_indices = @transform_5, window_bounds = array<i64: 1, 1>}, {transform_indices = @transform_6, window_bounds = array<i64: 1, 128>}]} {
    %c0 = arith.constant 0 : index
    %c0_0 = arith.constant 0 : index
    %0 = vector.load %arg1[%c0, %c0_0] : memref<8x128xf32, #tpu.memory_space<vmem>>, vector<8x128xf32>
    %c0_1 = arith.constant 0 : index
    %c0_2 = arith.constant 0 : index
    %1 = vector.load %arg2[%c0_1, %c0_2] : memref<64x1xf32, #tpu.memory_space<vmem>>, vector<64x1xf32>
    %c0_3 = arith.constant 0 : index
    %c0_4 = arith.constant 0 : index
    %2 = vector.load %arg3[%c0_3, %c0_4] : memref<64x64xf32, #tpu.memory_space<vmem>>, vector<64x64xf32>
    %c0_5 = arith.constant 0 : index
    %c0_6 = arith.constant 0 : index
    %3 = vector.load %arg4[%c0_5, %c0_6] : memref<64x1xf32, #tpu.memory_space<vmem>>, vector<64x1xf32>
    %4 = vector.shape_cast %0 : vector<8x128xf32> to vector<8x1x128xf32>
    %5 = vector.shape_cast %1 : vector<64x1xf32> to vector<1x64x1xf32>
    %6 = vector.broadcast %4 : vector<8x1x128xf32> to vector<8x64x128xf32>
    %7 = vector.broadcast %5 : vector<1x64x1xf32> to vector<8x64x128xf32>
    %8 = arith.mulf %6, %7 : vector<8x64x128xf32>
    %9 = vector.shape_cast %3 : vector<64x1xf32> to vector<1x64x1xf32>
    %10 = vector.broadcast %9 : vector<1x64x1xf32> to vector<8x64x128xf32>
    %11 = arith.addf %8, %10 : vector<8x64x128xf32>
    %12 = vector.extract_strided_slice %11 {offsets = [0, 0, 0], sizes = [1, 64, 128], strides = [1, 1, 1]} : vector<8x64x128xf32> to vector<1x64x128xf32>
    %13 = vector.shape_cast %12 : vector<1x64x128xf32> to vector<64x128xf32>
    %14 = math.tanh %13 : vector<64x128xf32>
    %cst = arith.constant dense<0.000000e+00> : vector<64x128xf32>
    %15 = tpu.matmul %2, %14, %cst {dimension_numbers = #tpu.dot_dimension_numbers<[1], [0], [0], [1], [0, 0, 1, 1], [], []>} : vector<64x64xf32>, vector<64x128xf32>, vector<64x128xf32> -> vector<64x128xf32>
    %16 = vector.extract_strided_slice %11 {offsets = [1, 0, 0], sizes = [1, 64, 128], strides = [1, 1, 1]} : vector<8x64x128xf32> to vector<1x64x128xf32>
    %17 = vector.shape_cast %16 : vector<1x64x128xf32> to vector<64x128xf32>
    %18 = arith.addf %15, %17 : vector<64x128xf32>
    %19 = math.tanh %18 : vector<64x128xf32>
    %cst_7 = arith.constant dense<0.000000e+00> : vector<64x128xf32>
    %20 = tpu.matmul %2, %19, %cst_7 {dimension_numbers = #tpu.dot_dimension_numbers<[1], [0], [0], [1], [0, 0, 1, 1], [], []>} : vector<64x64xf32>, vector<64x128xf32>, vector<64x128xf32> -> vector<64x128xf32>
    %21 = vector.extract_strided_slice %11 {offsets = [2, 0, 0], sizes = [1, 64, 128], strides = [1, 1, 1]} : vector<8x64x128xf32> to vector<1x64x128xf32>
    %22 = vector.shape_cast %21 : vector<1x64x128xf32> to vector<64x128xf32>
    %23 = arith.addf %20, %22 : vector<64x128xf32>
    %24 = math.tanh %23 : vector<64x128xf32>
    %cst_8 = arith.constant dense<0.000000e+00> : vector<64x128xf32>
    %25 = tpu.matmul %2, %24, %cst_8 {dimension_numbers = #tpu.dot_dimension_numbers<[1], [0], [0], [1], [0, 0, 1, 1], [], []>} : vector<64x64xf32>, vector<64x128xf32>, vector<64x128xf32> -> vector<64x128xf32>
    %26 = vector.extract_strided_slice %11 {offsets = [3, 0, 0], sizes = [1, 64, 128], strides = [1, 1, 1]} : vector<8x64x128xf32> to vector<1x64x128xf32>
    %27 = vector.shape_cast %26 : vector<1x64x128xf32> to vector<64x128xf32>
    %28 = arith.addf %25, %27 : vector<64x128xf32>
    %29 = math.tanh %28 : vector<64x128xf32>
    %cst_9 = arith.constant dense<0.000000e+00> : vector<64x128xf32>
    %30 = tpu.matmul %2, %29, %cst_9 {dimension_numbers = #tpu.dot_dimension_numbers<[1], [0], [0], [1], [0, 0, 1, 1], [], []>} : vector<64x64xf32>, vector<64x128xf32>, vector<64x128xf32> -> vector<64x128xf32>
    %31 = vector.extract_strided_slice %11 {offsets = [4, 0, 0], sizes = [1, 64, 128], strides = [1, 1, 1]} : vector<8x64x128xf32> to vector<1x64x128xf32>
    %32 = vector.shape_cast %31 : vector<1x64x128xf32> to vector<64x128xf32>
    %33 = arith.addf %30, %32 : vector<64x128xf32>
    %34 = math.tanh %33 : vector<64x128xf32>
    %cst_10 = arith.constant dense<0.000000e+00> : vector<64x128xf32>
    %35 = tpu.matmul %2, %34, %cst_10 {dimension_numbers = #tpu.dot_dimension_numbers<[1], [0], [0], [1], [0, 0, 1, 1], [], []>} : vector<64x64xf32>, vector<64x128xf32>, vector<64x128xf32> -> vector<64x128xf32>
    %36 = vector.extract_strided_slice %11 {offsets = [5, 0, 0], sizes = [1, 64, 128], strides = [1, 1, 1]} : vector<8x64x128xf32> to vector<1x64x128xf32>
    %37 = vector.shape_cast %36 : vector<1x64x128xf32> to vector<64x128xf32>
    %38 = arith.addf %35, %37 : vector<64x128xf32>
    %39 = math.tanh %38 : vector<64x128xf32>
    %cst_11 = arith.constant dense<0.000000e+00> : vector<64x128xf32>
    %40 = tpu.matmul %2, %39, %cst_11 {dimension_numbers = #tpu.dot_dimension_numbers<[1], [0], [0], [1], [0, 0, 1, 1], [], []>} : vector<64x64xf32>, vector<64x128xf32>, vector<64x128xf32> -> vector<64x128xf32>
    %41 = vector.extract_strided_slice %11 {offsets = [6, 0, 0], sizes = [1, 64, 128], strides = [1, 1, 1]} : vector<8x64x128xf32> to vector<1x64x128xf32>
    %42 = vector.shape_cast %41 : vector<1x64x128xf32> to vector<64x128xf32>
    %43 = arith.addf %40, %42 : vector<64x128xf32>
    %44 = math.tanh %43 : vector<64x128xf32>
    %cst_12 = arith.constant dense<0.000000e+00> : vector<64x128xf32>
    %45 = tpu.matmul %2, %44, %cst_12 {dimension_numbers = #tpu.dot_dimension_numbers<[1], [0], [0], [1], [0, 0, 1, 1], [], []>} : vector<64x64xf32>, vector<64x128xf32>, vector<64x128xf32> -> vector<64x128xf32>
    %46 = vector.extract_strided_slice %11 {offsets = [7, 0, 0], sizes = [1, 64, 128], strides = [1, 1, 1]} : vector<8x64x128xf32> to vector<1x64x128xf32>
    %47 = vector.shape_cast %46 : vector<1x64x128xf32> to vector<64x128xf32>
    %48 = arith.addf %45, %47 : vector<64x128xf32>
    %49 = math.tanh %48 : vector<64x128xf32>
    %c0_13 = arith.constant 0 : index
    %c0_14 = arith.constant 0 : index
    %50 = vector.load %arg5[%c0_13, %c0_14] : memref<64x1xf32, #tpu.memory_space<vmem>>, vector<64x1xf32>
    %51 = vector.broadcast %50 : vector<64x1xf32> to vector<64x128xf32>
    %52 = arith.mulf %49, %51 : vector<64x128xf32>
    %cst_15 = arith.constant dense<0.000000e+00> : vector<128xf32>
    %53 = vector.multi_reduction <add>, %52, %cst_15 [0] : vector<64x128xf32> to vector<128xf32>
    %54 = vector.shape_cast %53 : vector<128xf32> to vector<1x128xf32>
    %c0_16 = arith.constant 0 : index
    %c0_17 = arith.constant 0 : index
    %55 = vector.load %arg6[%c0_16, %c0_17] : memref<1x1xf32, #tpu.memory_space<vmem>>, vector<1x1xf32>
    %56 = vector.broadcast %55 : vector<1x1xf32> to vector<1x128xf32>
    %57 = arith.addf %54, %56 : vector<1x128xf32>
    %58 = arith.negf %57 : vector<1x128xf32>
    %59 = math.exp %58 : vector<1x128xf32>
    %cst_18 = arith.constant 1.000000e+00 : f32
    %60 = vector.broadcast %cst_18 : f32 to vector<1x128xf32>
    %61 = arith.addf %60, %59 : vector<1x128xf32>
    %62 = arith.divf %60, %61 : vector<1x128xf32>
    %c0_19 = arith.constant 0 : index
    %c0_20 = arith.constant 0 : index
    %63 = vector.load %arg7[%c0_19, %c0_20] : memref<1x128xf32, #tpu.memory_space<vmem>>, vector<1x128xf32>
    tpu.vector_store %arg7[%c0_19, %c0_20], %62 {strides = array<i32>} : memref<1x128xf32, #tpu.memory_space<vmem>>, vector<1x128xf32>,
    return
  }
  func.func @transform_0(%arg0: i32) -> (i32, i32) {
    %c0_i32 = arith.constant 0 : i32
    %c0_i32_0 = arith.constant 0 : i32
    return %c0_i32, %arg0 : i32, i32
  }
  func.func @transform_1(%arg0: i32) -> (i32, i32) {
    %c0_i32 = arith.constant 0 : i32
    %c0_i32_0 = arith.constant 0 : i32
    %c0_i32_1 = arith.constant 0 : i32
    return %c0_i32, %c0_i32_0 : i32, i32
  }
  func.func @transform_2(%arg0: i32) -> (i32, i32) {
    %c0_i32 = arith.constant 0 : i32
    %c0_i32_0 = arith.constant 0 : i32
    %c0_i32_1 = arith.constant 0 : i32
    return %c0_i32, %c0_i32_0 : i32, i32
  }
  func.func @transform_3(%arg0: i32) -> (i32, i32) {
    %c0_i32 = arith.constant 0 : i32
    %c0_i32_0 = arith.constant 0 : i32
    %c0_i32_1 = arith.constant 0 : i32
    return %c0_i32, %c0_i32_0 : i32, i32
  }
  func.func @transform_4(%arg0: i32) -> (i32, i32) {
    %c0_i32 = arith.constant 0 : i32
    %c0_i32_0 = arith.constant 0 : i32
    %c0_i32_1 = arith.constant 0 : i32
    return %c0_i32, %c0_i32_0 : i32, i32
  }
  func.func @transform_5(%arg0: i32) -> (i32, i32) {
    %c0_i32 = arith.constant 0 : i32
    %c0_i32_0 = arith.constant 0 : i32
    %c0_i32_1 = arith.constant 0 : i32
    return %c0_i32, %c0_i32_0 : i32, i32
  }
  func.func @transform_6(%arg0: i32) -> (i32, i32) {
    %c0_i32 = arith.constant 0 : i32
    %c0_i32_0 = arith.constant 0 : i32
    return %c0_i32, %arg0 : i32, i32
  }
}

</mosaic_0001>

<llo_original>
// kernel: rnn_classifier_forward.1
$region0: #{rnn_classifier_forward.1}
  #allocation0 [shape = 'u32[]', space=smem, size = 0x4, offset = 0x4, fixed_abs, tag = 'smem constant byte address 0x4 - core index']
  #allocation1 [shape = 'u32[144,128]{1,0:T(1,128)}', space=vmem, size = 0x12000, scoped, tag = 'internal scratch']
  #allocation2 [shape = 'f32[1,1]{1,0:T(1,128)S(1)}', space=vmem, size = 0x200, scoped, tag = 'scoped memory for rnn_classifier_forward.1']
  %s0 = inlined_call_operand.vmem [shape: f32[8,128], index: 0, kind: input, shape index: {}]
  %s1 = inlined_call_operand.vmem [shape: f32[64,1], index: 1, kind: input, shape index: {}]
  %s2 = inlined_call_operand.vmem [shape: f32[64,64], index: 2, kind: input, shape index: {}]
  %s3 = inlined_call_operand.vmem [shape: f32[64,1], index: 3, kind: input, shape index: {}]
  %s4 = inlined_call_operand.vmem [shape: f32[64,1], index: 4, kind: input, shape index: {}]
  %s5 = inlined_call_operand.<no memory space> [shape: f32[1,1], index: 5, kind: input, shape index: {}]
  %s6 = inlined_call_operand.vmem [shape: f32[1,128], index: 6, kind: output, shape index: {}]
  %s7 = sld [smem:[#allocation0]]
  $region34: #{rnn_classifier_forward.1} parent=0
    _
  %s9 = ssub.s32 1, %s7
  %s10 = scalar_select 0, %s9, %s7
  %v11 = vstv %s5
  %12 = vst [vmem:[#allocation2] sm:$0x1] %v11
  // Predicated region
  $region2: #{rnn_classifier_forward.1} parent=0 // pred_check
    _
  $region3: #{rnn_classifier_forward.1} parent=0 // pred_check_branch
    %14 = sbr.rel (0) target = $region5
  $region4: #{rnn_classifier_forward.1} parent=0 // pred_region
    _
  $region5: #{rnn_classifier_forward.1} parent=0 // pred_fallthru
    _
  // Predicated region
  $region6: #{rnn_classifier_forward.1} parent=0 // pred_check
    _
  $region7: #{rnn_classifier_forward.1} parent=0 // pred_check_branch
    %16 = sbr.rel (0) target = $region9
  $region8: #{rnn_classifier_forward.1} parent=0 // pred_region
    _
  $region9: #{rnn_classifier_forward.1} parent=0 // pred_fallthru
    _
  // Predicated region
  $region10: #{rnn_classifier_forward.1} parent=0 // pred_check
    _
  $region11: #{rnn_classifier_forward.1} parent=0 // pred_check_branch
    %18 = sbr.rel (0) target = $region13
  $region12: #{rnn_classifier_forward.1} parent=0 // pred_region
    _
  $region13: #{rnn_classifier_forward.1} parent=0 // pred_fallthru
    _
  // Predicated region
  $region14: #{rnn_classifier_forward.1} parent=0 // pred_check
    _
  $region15: #{rnn_classifier_forward.1} parent=0 // pred_check_branch
    %20 = sbr.rel (0) target = $region17
  $region16: #{rnn_classifier_forward.1} parent=0 // pred_region
    _
  $region17: #{rnn_classifier_forward.1} parent=0 // pred_fallthru
    _
  // Predicated region
  $region18: #{rnn_classifier_forward.1} parent=0 // pred_check
    _
  $region19: #{rnn_classifier_forward.1} parent=0 // pred_check_branch
    %22 = sbr.rel (0) target = $region21
  $region20: #{rnn_classifier_forward.1} parent=0 // pred_region
    _
  $region21: #{rnn_classifier_forward.1} parent=0 // pred_fallthru
    _
  // Predicated region
  $region22: #{rnn_classifier_forward.1} parent=0 // pred_check
    _
  $region23: #{rnn_classifier_forward.1} parent=0 // pred_check_branch
    %24 = sbr.rel (0) target = $region25
  $region24: #{rnn_classifier_forward.1} parent=0 // pred_region
    _
  $region25: #{rnn_classifier_forward.1} parent=0 // pred_fallthru
    _
  %v25 = vld [vmem:[%s0] sm:$0xff]
  %v26 = vld [vmem:[%s1] sm:$0xff]
  %v27 = vld [vmem:[%s1 + $0x8] sm:$0xff]
  %v28 = vld [vmem:[%s1 + $0x10] sm:$0xff]
  %v29 = vld [vmem:[%s1 + $0x18] sm:$0xff]
  %v30 = vld [vmem:[%s1 + $0x20] sm:$0xff]
  %v31 = vld [vmem:[%s1 + $0x28] sm:$0xff]
  %v32 = vld [vmem:[%s1 + $0x30] sm:$0xff]
  %v33 = vld [vmem:[%s1 + $0x38] sm:$0xff]
  %v34 = vld [vmem:[%s2] sm:$0xff]
  %v35 = vld [vmem:[%s2 + $0x8] sm:$0xff]
  %v36 = vld [vmem:[%s2 + $0x10] sm:$0xff]
  %v37 = vld [vmem:[%s2 + $0x18] sm:$0xff]
  %v38 = vld [vmem:[%s2 + $0x20] sm:$0xff]
  %v39 = vld [vmem:[%s2 + $0x28] sm:$0xff]
  %v40 = vld [vmem:[%s2 + $0x30] sm:$0xff]
  %v41 = vld [vmem:[%s2 + $0x38] sm:$0xff]
  %v42 = vld [vmem:[%s3] sm:$0xff]
  %v43 = vld [vmem:[%s3 + $0x8] sm:$0xff]
  %v44 = vld [vmem:[%s3 + $0x10] sm:$0xff]
  %v45 = vld [vmem:[%s3 + $0x18] sm:$0xff]
  %v46 = vld [vmem:[%s3 + $0x20] sm:$0xff]
  %v47 = vld [vmem:[%s3 + $0x28] sm:$0xff]
  %v48 = vld [vmem:[%s3 + $0x30] sm:$0xff]
  %v49 = vld [vmem:[%s3 + $0x38] sm:$0xff]
  %v51 = vcombine.high %v25, %v25
  %v53 = vunpack.c.l.s4 1966171168
  %v54 = vunpack.c.0.s8 %v53
  %v55 = vlaneseq
  %v56 = vshrl.u32 %v55, 7
  %v57 = vsub.s32 %v54, %v56
  %v58 = vrot.slane %v25, %v57
  %v60 = vunpack.c.l.s4 1966171168
  %v61 = vunpack.c.0.s8 %v60
  %v62 = vlaneseq
  %v63 = vshrl.u32 %v62, 7
  %v64 = vsub.s32 %v61, %v63
  %v65 = vrot.slane %v51, %v64
  %v66 = vcombine.high %v58, %v58
  %v67 = vcombine.high %v65, %v65
  %v69 = vunpack.c.l.s4 1966171168
  %v70 = vunpack.c.0.s8 %v69
  %v71 = vlaneseq
  %v72 = vshrl.u32 %v71, 7
  %v73 = vsub.s32 %v70, %v72
  %v74 = vrot.slane %v58, %v73
  %v76 = vunpack.c.l.s4 1966171168
  %v77 = vunpack.c.0.s8 %v76
  %v78 = vlaneseq
  %v79 = vshrl.u32 %v78, 7
  %v80 = vsub.s32 %v77, %v79
  %v81 = vrot.slane %v65, %v80
  %v83 = vunpack.c.l.s4 1966171168
  %v84 = vunpack.c.0.s8 %v83
  %v85 = vlaneseq
  %v86 = vshrl.u32 %v85, 7
  %v87 = vsub.s32 %v84, %v86
  %v88 = vrot.slane %v66, %v87
  %v90 = vunpack.c.l.s4 1966171168
  %v91 = vunpack.c.0.s8 %v90
  %v92 = vlaneseq
  %v93 = vshrl.u32 %v92, 7
  %v94 = vsub.s32 %v91, %v93
  %v95 = vrot.slane %v67, %v94
  %v96 = vcombine.high %v74, %v74
  %v97 = vcombine.high %v81, %v81
  %v98 = vcombine.high %v88, %v88
  %v99 = vcombine.high %v95, %v95
  %v100 = vlaneseq
  %v101 = vshrl.u32 %v100, 7
  %v102 = vsub.s32 0, %v101
  %v103 = vrot.slane %v74, %v102
  %v104 = vlaneseq
  %v105 = vshrl.u32 %v104, 7
  %v106 = vsub.s32 0, %v105
  %v107 = vrot.slane %v88, %v106
  %v108 = vlaneseq
  %v109 = vshrl.u32 %v108, 7
  %v110 = vsub.s32 0, %v109
  %v111 = vrot.slane %v96, %v110
  %v112 = vlaneseq
  %v113 = vshrl.u32 %v112, 7
  %v114 = vsub.s32 0, %v113
  %v115 = vrot.slane %v98, %v114
  %v116 = vlaneseq
  %v117 = vshrl.u32 %v116, 7
  %v118 = vsub.s32 0, %v117
  %v119 = vrot.slane %v81, %v118
  %v120 = vlaneseq
  %v121 = vshrl.u32 %v120, 7
  %v122 = vsub.s32 0, %v121
  %v123 = vrot.slane %v95, %v122
  %v124 = vlaneseq
  %v125 = vshrl.u32 %v124, 7
  %v126 = vsub.s32 0, %v125
  %v127 = vrot.slane %v97, %v126
  %v128 = vlaneseq
  %v129 = vshrl.u32 %v128, 7
  %v130 = vsub.s32 0, %v129
  %v131 = vrot.slane %v99, %v130
  %141 = vset.pattern.permute.xlu0 0
  %142 = vperm.xlu0 %141, %v26
  %v143 = vpop.permute.xlu0 %142
  %146 = vset.pattern.permute.xlu0 0
  %147 = vperm.xlu0 %146, %v27
  %v148 = vpop.permute.xlu0 %147
  %151 = vset.pattern.permute.xlu0 0
  %152 = vperm.xlu0 %151, %v28
  %v153 = vpop.permute.xlu0 %152
  %156 = vset.pattern.permute.xlu0 0
  %157 = vperm.xlu0 %156, %v29
  %v158 = vpop.permute.xlu0 %157
  %161 = vset.pattern.permute.xlu0 0
  %162 = vperm.xlu0 %161, %v30
  %v163 = vpop.permute.xlu0 %162
  %166 = vset.pattern.permute.xlu0 0
  %167 = vperm.xlu0 %166, %v31
  %v168 = vpop.permute.xlu0 %167
  %171 = vset.pattern.permute.xlu0 0
  %172 = vperm.xlu0 %171, %v32
  %v173 = vpop.permute.xlu0 %172
  %176 = vset.pattern.permute.xlu0 0
  %177 = vperm.xlu0 %176, %v33
  %v178 = vpop.permute.xlu0 %177
  %v180 = vmul.f32 %v103, %v143
  %v181 = vmul.f32 %v103, %v148
  %v182 = vmul.f32 %v103, %v153
  %v183 = vmul.f32 %v103, %v158
  %v184 = vmul.f32 %v103, %v163
  %v185 = vmul.f32 %v103, %v168
  %v186 = vmul.f32 %v103, %v173
  %v187 = vmul.f32 %v103, %v178
  %v188 = vmul.f32 %v107, %v143
  %v189 = vmul.f32 %v107, %v148
  %v190 = vmul.f32 %v107, %v153
  %v191 = vmul.f32 %v107, %v158
  %v192 = vmul.f32 %v107, %v163
  %v193 = vmul.f32 %v107, %v168
  %v194 = vmul.f32 %v107, %v173
  %v195 = vmul.f32 %v107, %v178
  %v196 = vmul.f32 %v111, %v143
  %v197 = vmul.f32 %v111, %v148
  %v198 = vmul.f32 %v111, %v153
  %v199 = vmul.f32 %v111, %v158
  %v200 = vmul.f32 %v111, %v163
  %v201 = vmul.f32 %v111, %v168
  %v202 = vmul.f32 %v111, %v173
  %v203 = vmul.f32 %v111, %v178
  %v204 = vmul.f32 %v115, %v143
  %v205 = vmul.f32 %v115, %v148
  %v206 = vmul.f32 %v115, %v153
  %v207 = vmul.f32 %v115, %v158
  %v208 = vmul.f32 %v115, %v163
  %v209 = vmul.f32 %v115, %v168
  %v210 = vmul.f32 %v115, %v173
  %v211 = vmul.f32 %v115, %v178
  %v212 = vmul.f32 %v119, %v143
  %v213 = vmul.f32 %v119, %v148
  %v214 = vmul.f32 %v119, %v153
  %v215 = vmul.f32 %v119, %v158
  %v216 = vmul.f32 %v119, %v163
  %v217 = vmul.f32 %v119, %v168
  %v218 = vmul.f32 %v119, %v173
  %v219 = vmul.f32 %v119, %v178
  %v220 = vmul.f32 %v123, %v143
  %v221 = vmul.f32 %v123, %v148
  %v222 = vmul.f32 %v123, %v153
  %v223 = vmul.f32 %v123, %v158
  %v224 = vmul.f32 %v123, %v163
  %v225 = vmul.f32 %v123, %v168
  %v226 = vmul.f32 %v123, %v173
  %v227 = vmul.f32 %v123, %v178
  %v228 = vmul.f32 %v127, %v143
  %v229 = vmul.f32 %v127, %v148
  %v230 = vmul.f32 %v127, %v153
  %v231 = vmul.f32 %v127, %v158
  %v232 = vmul.f32 %v127, %v163
  %v233 = vmul.f32 %v127, %v168
  %v234 = vmul.f32 %v127, %v173
  %v235 = vmul.f32 %v127, %v178
  %v236 = vmul.f32 %v131, %v143
  %v237 = vmul.f32 %v131, %v148
  %v238 = vmul.f32 %v131, %v153
  %v239 = vmul.f32 %v131, %v158
  %v240 = vmul.f32 %v131, %v163
  %v241 = vmul.f32 %v131, %v168
  %v242 = vmul.f32 %v131, %v173
  %v243 = vmul.f32 %v131, %v178
  %245 = vset.pattern.permute.xlu0 0
  %246 = vperm.xlu0 %245, %v42
  %v247 = vpop.permute.xlu0 %246
  %250 = vset.pattern.permute.xlu0 0
  %251 = vperm.xlu0 %250, %v43
  %v252 = vpop.permute.xlu0 %251
  %255 = vset.pattern.permute.xlu0 0
  %256 = vperm.xlu0 %255, %v44
  %v257 = vpop.permute.xlu0 %256
  %260 = vset.pattern.permute.xlu0 0
  %261 = vperm.xlu0 %260, %v45
  %v262 = vpop.permute.xlu0 %261
  %265 = vset.pattern.permute.xlu0 0
  %266 = vperm.xlu0 %265, %v46
  %v267 = vpop.permute.xlu0 %266
  %270 = vset.pattern.permute.xlu0 0
  %271 = vperm.xlu0 %270, %v47
  %v272 = vpop.permute.xlu0 %271
  %275 = vset.pattern.permute.xlu0 0
  %276 = vperm.xlu0 %275, %v48
  %v277 = vpop.permute.xlu0 %276
  %280 = vset.pattern.permute.xlu0 0
  %281 = vperm.xlu0 %280, %v49
  %v282 = vpop.permute.xlu0 %281
  %v284 = vadd.f32 %v180, %v247
  %v285 = vadd.f32 %v181, %v252
  %v286 = vadd.f32 %v182, %v257
  %v287 = vadd.f32 %v183, %v262
  %v288 = vadd.f32 %v184, %v267
  %v289 = vadd.f32 %v185, %v272
  %v290 = vadd.f32 %v186, %v277
  %v291 = vadd.f32 %v187, %v282
  %v292 = vadd.f32 %v188, %v247
  %v293 = vadd.f32 %v189, %v252
  %v294 = vadd.f32 %v190, %v257
  %v295 = vadd.f32 %v191, %v262
  %v296 = vadd.f32 %v192, %v267
  %v297 = vadd.f32 %v193, %v272
  %v298 = vadd.f32 %v194, %v277
  %v299 = vadd.f32 %v195, %v282
  %v300 = vadd.f32 %v196, %v247
  %v301 = vadd.f32 %v197, %v252
  %v302 = vadd.f32 %v198, %v257
  %v303 = vadd.f32 %v199, %v262
  %v304 = vadd.f32 %v200, %v267
  %v305 = vadd.f32 %v201, %v272
  %v306 = vadd.f32 %v202, %v277
  %v307 = vadd.f32 %v203, %v282
  %v308 = vadd.f32 %v204, %v247
  %v309 = vadd.f32 %v205, %v252
  %v310 = vadd.f32 %v206, %v257
  %v311 = vadd.f32 %v207, %v262
  %v312 = vadd.f32 %v208, %v267
  %v313 = vadd.f32 %v209, %v272
  %v314 = vadd.f32 %v210, %v277
  %v315 = vadd.f32 %v211, %v282
  %v316 = vadd.f32 %v212, %v247
  %v317 = vadd.f32 %v213, %v252
  %v318 = vadd.f32 %v214, %v257
  %v319 = vadd.f32 %v215, %v262
  %v320 = vadd.f32 %v216, %v267
  %v321 = vadd.f32 %v217, %v272
  %v322 = vadd.f32 %v218, %v277
  %v323 = vadd.f32 %v219, %v282
  %v324 = vadd.f32 %v220, %v247
  %v325 = vadd.f32 %v221, %v252
  %v326 = vadd.f32 %v222, %v257
  %v327 = vadd.f32 %v223, %v262
  %v328 = vadd.f32 %v224, %v267
  %v329 = vadd.f32 %v225, %v272
  %v330 = vadd.f32 %v226, %v277
  %v331 = vadd.f32 %v227, %v282
  %v332 = vadd.f32 %v228, %v247
  %v333 = vadd.f32 %v229, %v252
  %v334 = vadd.f32 %v230, %v257
  %v335 = vadd.f32 %v231, %v262
  %v336 = vadd.f32 %v232, %v267
  %v337 = vadd.f32 %v233, %v272
  %v338 = vadd.f32 %v234, %v277
  %v339 = vadd.f32 %v235, %v282
  %v340 = vadd.f32 %v236, %v247
  %v341 = vadd.f32 %v237, %v252
  %v342 = vadd.f32 %v238, %v257
  %v343 = vadd.f32 %v239, %v262
  %v344 = vadd.f32 %v240, %v267
  %v345 = vadd.f32 %v241, %v272
  %v346 = vadd.f32 %v242, %v277
  %v347 = vadd.f32 %v243, %v282
  %v348 = vtanh.pop %v284
  %v349 = vtanh.pop %v285
  %v350 = vtanh.pop %v286
  %v351 = vtanh.pop %v287
  %v352 = vtanh.pop %v288
  %v353 = vtanh.pop %v289
  %v354 = vtanh.pop %v290
  %v355 = vtanh.pop %v291
  %vm356 = vcmask 523264
  %v358 = vsel %vm356, %v34, 0
  %v361 = vsel %vm356, %v35, 0
  %v364 = vsel %vm356, %v36, 0
  %v367 = vsel %vm356, %v37, 0
  %v370 = vsel %vm356, %v38, 0
  %v373 = vsel %vm356, %v39, 0
  %v376 = vsel %vm356, %v40, 0
  %v379 = vsel %vm356, %v41, 0
  %381 = vmatprep.subr.mxu0 0.0
  %382 = vmatpush1.msra.mxu0 %v348
  %383 = vmatprep.subr.mxu0 0.0
  %384 = vmatpush1.msra.mxu0 %v349
  %385 = vmatprep.subr.mxu0 0.0
  %386 = vmatpush1.msra.mxu0 %v350
  %387 = vmatprep.subr.mxu0 0.0
  %388 = vmatpush1.msra.mxu0 %v351
  %389 = vmatprep.subr.mxu0 0.0
  %390 = vmatpush1.msra.mxu0 %v352
  %391 = vmatprep.subr.mxu0 0.0
  %392 = vmatpush1.msra.mxu0 %v353
  %393 = vmatprep.subr.mxu0 0.0
  %394 = vmatpush1.msra.mxu0 %v354
  %395 = vmatprep.subr.mxu0 0.0
  %396 = vmatpush1.msra.mxu0 %v355
  %397 = vmatprep.subr.mxu0 0.0
  %398 = vmatpush1.msra.mxu0 0.0
  %399 = vmatprep.subr.mxu0 0.0
  %400 = vmatpush1.msra.mxu0 0.0
  %401 = vmatprep.subr.mxu0 0.0
  %402 = vmatpush1.msra.mxu0 0.0
  %403 = vmatprep.subr.mxu0 0.0
  %404 = vmatpush1.msra.mxu0 0.0
  %405 = vmatprep.subr.mxu0 0.0
  %406 = vmatpush1.msra.mxu0 0.0
  %407 = vmatprep.subr.mxu0 0.0
  %408 = vmatpush1.msra.mxu0 0.0
  %409 = vmatprep.subr.mxu0 0.0
  %410 = vmatpush1.msra.mxu0 0.0
  %411 = vmatprep.subr.mxu0 0.0
  %412 = vmatpush1.msra.mxu0 0.0
  %413 = vmatprep.subr.mxu0 0.0
  %414 = vmatpush1.msra.mxu0 0.0
  %415 = vmatprep.subr.mxu0 0.0
  %416 = vmatpush1.msra.mxu0 0.0
  %417 = vmatprep.subr.mxu0 0.0
  %418 = vmatpush1.msra.mxu0 0.0
  %419 = vmatprep.subr.mxu0 0.0
  %420 = vmatpush1.msra.mxu0 0.0
  %421 = vmatprep.subr.mxu0 0.0
  %422 = vmatpush1.msra.mxu0 0.0
  %423 = vmatprep.subr.mxu0 0.0
  %424 = vmatpush1.msra.mxu0 0.0
  %425 = vmatprep.subr.mxu0 0.0
  %426 = vmatpush1.msra.mxu0 0.0
  %427 = vmatprep.subr.mxu0 0.0
  %428 = vmatpush1.msra.mxu0 0.0
  %429 = vmatprep.subr.mxu0 0.0
  %430 = vmatpush1.msra.mxu0 0.0
  %431 = vmatprep.subr.mxu0 0.0
  %432 = vmatpush1.msra.mxu0 0.0
  %433 = vmatprep.subr.mxu0 0.0
  %434 = vmatpush1.msra.mxu0 0.0
  %435 = vmatprep.subr.mxu0 0.0
  %436 = vmatpush1.msra.mxu0 0.0
  %437 = vmatprep.subr.mxu0 0.0
  %438 = vmatpush1.msra.mxu0 0.0
  %439 = vmatprep.subr.mxu0 0.0
  %440 = vmatpush1.msra.mxu0 0.0
  %441 = vmatprep.subr.mxu0 0.0
  %442 = vmatpush1.msra.mxu0 0.0
  %443 = vmatprep.subr.mxu0 0.0
  %444 = vmatpush1.msra.mxu0 0.0
  %445 = vmatprep.mubr.f32.mxu0 0.0
  %446 = vmatmul.mubr.f32.gmra.mrb[0].mxu0 %v358
  %v447 = vpop.f32.mrb[0].mxu0
  %v448 = vadd.f32 %v292, %v447
  %v449 = vpop.f32.mrb[0].mxu0
  %450 = vmatprep.mubr.f32.mxu0 0.0
  %451 = vmatmul.mubr.f32.gmra.mrb[0].mxu0 %v361
  %v452 = vpop.f32.mrb[0].mxu0
  %v453 = vadd.f32 %v293, %v452
  %v454 = vpop.f32.mrb[0].mxu0
  %455 = vmatprep.mubr.f32.mxu0 0.0
  %456 = vmatmul.mubr.f32.gmra.mrb[0].mxu0 %v364
  %v457 = vpop.f32.mrb[0].mxu0
  %v458 = vadd.f32 %v294, %v457
  %v459 = vpop.f32.mrb[0].mxu0
  %460 = vmatprep.mubr.f32.mxu0 0.0
  %461 = vmatmul.mubr.f32.gmra.mrb[0].mxu0 %v367
  %v462 = vpop.f32.mrb[0].mxu0
  %v463 = vadd.f32 %v295, %v462
  %v464 = vpop.f32.mrb[0].mxu0
  %465 = vmatprep.mubr.f32.mxu0 0.0
  %466 = vmatmul.mubr.f32.gmra.mrb[0].mxu0 %v370
  %v467 = vpop.f32.mrb[0].mxu0
  %v468 = vadd.f32 %v296, %v467
  %v469 = vpop.f32.mrb[0].mxu0
  %470 = vmatprep.mubr.f32.mxu0 0.0
  %471 = vmatmul.mubr.f32.gmra.mrb[0].mxu0 %v373
  %v472 = vpop.f32.mrb[0].mxu0
  %v473 = vadd.f32 %v297, %v472
  %v474 = vpop.f32.mrb[0].mxu0
  %475 = vmatprep.mubr.f32.mxu0 0.0
  %476 = vmatmul.mubr.f32.gmra.mrb[0].mxu0 %v376
  %v477 = vpop.f32.mrb[0].mxu0
  %v478 = vadd.f32 %v298, %v477
  %v479 = vpop.f32.mrb[0].mxu0
  %480 = vmatprep.mubr.f32.mxu0 0.0
  %481 = vmatmul.mubr.f32.gmra.mrb[0].mxu0 %v379
  %v482 = vpop.f32.mrb[0].mxu0
  %v483 = vadd.f32 %v299, %v482
  %v484 = vpop.f32.mrb[0].mxu0
  %485 = vdwg.mxu0
  %v486 = vtanh.pop %v448
  %v487 = vtanh.pop %v453
  %v488 = vtanh.pop %v458
  %v489 = vtanh.pop %v463
  %v490 = vtanh.pop %v468
  %v491 = vtanh.pop %v473
  %v492 = vtanh.pop %v478
  %v493 = vtanh.pop %v483
  %494 = vmatprep.subr.mxu0 0.0
  %495 = vmatpush1.msra.mxu0 %v486
  %496 = vmatprep.subr.mxu0 0.0
  %497 = vmatpush1.msra.mxu0 %v487
  %498 = vmatprep.subr.mxu0 0.0
  %499 = vmatpush1.msra.mxu0 %v488
  %500 = vmatprep.subr.mxu0 0.0
  %501 = vmatpush1.msra.mxu0 %v489
  %502 = vmatprep.subr.mxu0 0.0
  %503 = vmatpush1.msra.mxu0 %v490
  %504 = vmatprep.subr.mxu0 0.0
  %505 = vmatpush1.msra.mxu0 %v491
  %506 = vmatprep.subr.mxu0 0.0
  %507 = vmatpush1.msra.mxu0 %v492
  %508 = vmatprep.subr.mxu0 0.0
  %509 = vmatpush1.msra.mxu0 %v493
  %510 = vmatprep.subr.mxu0 0.0
  %511 = vmatpush1.msra.mxu0 0.0
  %512 = vmatprep.subr.mxu0 0.0
  %513 = vmatpush1.msra.mxu0 0.0
  %514 = vmatprep.subr.mxu0 0.0
  %515 = vmatpush1.msra.mxu0 0.0
  %516 = vmatprep.subr.mxu0 0.0
  %517 = vmatpush1.msra.mxu0 0.0
  %518 = vmatprep.subr.mxu0 0.0
  %519 = vmatpush1.msra.mxu0 0.0
  %520 = vmatprep.subr.mxu0 0.0
  %521 = vmatpush1.msra.mxu0 0.0
  %522 = vmatprep.subr.mxu0 0.0
  %523 = vmatpush1.msra.mxu0 0.0
  %524 = vmatprep.subr.mxu0 0.0
  %525 = vmatpush1.msra.mxu0 0.0
  %526 = vmatprep.subr.mxu0 0.0
  %527 = vmatpush1.msra.mxu0 0.0
  %528 = vmatprep.subr.mxu0 0.0
  %529 = vmatpush1.msra.mxu0 0.0
  %530 = vmatprep.subr.mxu0 0.0
  %531 = vmatpush1.msra.mxu0 0.0
  %532 = vmatprep.subr.mxu0 0.0
  %533 = vmatpush1.msra.mxu0 0.0
  %534 = vmatprep.subr.mxu0 0.0
  %535 = vmatpush1.msra.mxu0 0.0
  %536 = vmatprep.subr.mxu0 0.0
  %537 = vmatpush1.msra.mxu0 0.0
  %538 = vmatprep.subr.mxu0 0.0
  %539 = vmatpush1.msra.mxu0 0.0
  %540 = vmatprep.subr.mxu0 0.0
  %541 = vmatpush1.msra.mxu0 0.0
  %542 = vmatprep.subr.mxu0 0.0
  %543 = vmatpush1.msra.mxu0 0.0
  %544 = vmatprep.subr.mxu0 0.0
  %545 = vmatpush1.msra.mxu0 0.0
  %546 = vmatprep.subr.mxu0 0.0
  %547 = vmatpush1.msra.mxu0 0.0
  %548 = vmatprep.subr.mxu0 0.0
  %549 = vmatpush1.msra.mxu0 0.0
  %550 = vmatprep.subr.mxu0 0.0
  %551 = vmatpush1.msra.mxu0 0.0
  %552 = vmatprep.subr.mxu0 0.0
  %553 = vmatpush1.msra.mxu0 0.0
  %554 = vmatprep.subr.mxu0 0.0
  %555 = vmatpush1.msra.mxu0 0.0
  %556 = vmatprep.subr.mxu0 0.0
  %557 = vmatpush1.msra.mxu0 0.0
  %558 = vmatprep.mubr.f32.mxu0 0.0
  %559 = vmatmul.mubr.f32.gmra.mrb[0].mxu0 %v358
  %v560 = vpop.f32.mrb[0].mxu0
  %v561 = vadd.f32 %v300, %v560
  %v562 = vpop.f32.mrb[0].mxu0
  %563 = vmatprep.mubr.f32.mxu0 0.0
  %564 = vmatmul.mubr.f32.gmra.mrb[0].mxu0 %v361
  %v565 = vpop.f32.mrb[0].mxu0
  %v566 = vadd.f32 %v301, %v565
  %v567 = vpop.f32.mrb[0].mxu0
  %568 = vmatprep.mubr.f32.mxu0 0.0
  %569 = vmatmul.mubr.f32.gmra.mrb[0].mxu0 %v364
  %v570 = vpop.f32.mrb[0].mxu0
  %v571 = vadd.f32 %v302, %v570
  %v572 = vpop.f32.mrb[0].mxu0
  %573 = vmatprep.mubr.f32.mxu0 0.0
  %574 = vmatmul.mubr.f32.gmra.mrb[0].mxu0 %v367
  %v575 = vpop.f32.mrb[0].mxu0
  %v576 = vadd.f32 %v303, %v575
  %v577 = vpop.f32.mrb[0].mxu0
  %578 = vmatprep.mubr.f32.mxu0 0.0
  %579 = vmatmul.mubr.f32.gmra.mrb[0].mxu0 %v370
  %v580 = vpop.f32.mrb[0].mxu0
  %v581 = vadd.f32 %v304, %v580
  %v582 = vpop.f32.mrb[0].mxu0
  %583 = vmatprep.mubr.f32.mxu0 0.0
  %584 = vmatmul.mubr.f32.gmra.mrb[0].mxu0 %v373
  %v585 = vpop.f32.mrb[0].mxu0
  %v586 = vadd.f32 %v305, %v585
  %v587 = vpop.f32.mrb[0].mxu0
  %588 = vmatprep.mubr.f32.mxu0 0.0
  %589 = vmatmul.mubr.f32.gmra.mrb[0].mxu0 %v376
  %v590 = vpop.f32.mrb[0].mxu0
  %v591 = vadd.f32 %v306, %v590
  %v592 = vpop.f32.mrb[0].mxu0
  %593 = vmatprep.mubr.f32.mxu0 0.0
  %594 = vmatmul.mubr.f32.gmra.mrb[0].mxu0 %v379
  %v595 = vpop.f32.mrb[0].mxu0
  %v596 = vadd.f32 %v307, %v595
  %v597 = vpop.f32.mrb[0].mxu0
  %598 = vdwg.mxu0
  %v599 = vtanh.pop %v561
  %v600 = vtanh.pop %v566
  %v601 = vtanh.pop %v571
  %v602 = vtanh.pop %v576
  %v603 = vtanh.pop %v581
  %v604 = vtanh.pop %v586
  %v605 = vtanh.pop %v591
  %v606 = vtanh.pop %v596
  %607 = vmatprep.subr.mxu0 0.0
  %608 = vmatpush1.msra.mxu0 %v599
  %609 = vmatprep.subr.mxu0 0.0
  %610 = vmatpush1.msra.mxu0 %v600
  %611 = vmatprep.subr.mxu0 0.0
  %612 = vmatpush1.msra.mxu0 %v601
  %613 = vmatprep.subr.mxu0 0.0
  %614 = vmatpush1.msra.mxu0 %v602
  %615 = vmatprep.subr.mxu0 0.0
  %616 = vmatpush1.msra.mxu0 %v603
  %617 = vmatprep.subr.mxu0 0.0
  %618 = vmatpush1.msra.mxu0 %v604
  %619 = vmatprep.subr.mxu0 0.0
  %620 = vmatpush1.msra.mxu0 %v605
  %621 = vmatprep.subr.mxu0 0.0
  %622 = vmatpush1.msra.mxu0 %v606
  %623 = vmatprep.subr.mxu0 0.0
  %624 = vmatpush1.msra.mxu0 0.0
  %625 = vmatprep.subr.mxu0 0.0
  %626 = vmatpush1.msra.mxu0 0.0
  %627 = vmatprep.subr.mxu0 0.0
  %628 = vmatpush1.msra.mxu0 0.0
  %629 = vmatprep.subr.mxu0 0.0
  %630 = vmatpush1.msra.mxu0 0.0
  %631 = vmatprep.subr.mxu0 0.0
  %632 = vmatpush1.msra.mxu0 0.0
  %633 = vmatprep.subr.mxu0 0.0
  %634 = vmatpush1.msra.mxu0 0.0
  %635 = vmatprep.subr.mxu0 0.0
  %636 = vmatpush1.msra.mxu0 0.0
  %637 = vmatprep.subr.mxu0 0.0
  %638 = vmatpush1.msra.mxu0 0.0
  %639 = vmatprep.subr.mxu0 0.0
  %640 = vmatpush1.msra.mxu0 0.0
  %641 = vmatprep.subr.mxu0 0.0
  %642 = vmatpush1.msra.mxu0 0.0
  %643 = vmatprep.subr.mxu0 0.0
  %644 = vmatpush1.msra.mxu0 0.0
  %645 = vmatprep.subr.mxu0 0.0
  %646 = vmatpush1.msra.mxu0 0.0
  %647 = vmatprep.subr.mxu0 0.0
  %648 = vmatpush1.msra.mxu0 0.0
  %649 = vmatprep.subr.mxu0 0.0
  %650 = vmatpush1.msra.mxu0 0.0
  %651 = vmatprep.subr.mxu0 0.0
  %652 = vmatpush1.msra.mxu0 0.0
  %653 = vmatprep.subr.mxu0 0.0
  %654 = vmatpush1.msra.mxu0 0.0
  %655 = vmatprep.subr.mxu0 0.0
  %656 = vmatpush1.msra.mxu0 0.0
  %657 = vmatprep.subr.mxu0 0.0
  %658 = vmatpush1.msra.mxu0 0.0
  %659 = vmatprep.subr.mxu0 0.0
  %660 = vmatpush1.msra.mxu0 0.0
  %661 = vmatprep.subr.mxu0 0.0
  %662 = vmatpush1.msra.mxu0 0.0
  %663 = vmatprep.subr.mxu0 0.0
  %664 = vmatpush1.msra.mxu0 0.0
  %665 = vmatprep.subr.mxu0 0.0
  %666 = vmatpush1.msra.mxu0 0.0
  %667 = vmatprep.subr.mxu0 0.0
  %668 = vmatpush1.msra.mxu0 0.0
  %669 = vmatprep.subr.mxu0 0.0
  %670 = vmatpush1.msra.mxu0 0.0
  %671 = vmatprep.mubr.f32.mxu0 0.0
  %672 = vmatmul.mubr.f32.gmra.mrb[0].mxu0 %v358
  %v673 = vpop.f32.mrb[0].mxu0
  %v674 = vadd.f32 %v308, %v673
  %v675 = vpop.f32.mrb[0].mxu0
  %676 = vmatprep.mubr.f32.mxu0 0.0
  %677 = vmatmul.mubr.f32.gmra.mrb[0].mxu0 %v361
  %v678 = vpop.f32.mrb[0].mxu0
  %v679 = vadd.f32 %v309, %v678
  %v680 = vpop.f32.mrb[0].mxu0
  %681 = vmatprep.mubr.f32.mxu0 0.0
  %682 = vmatmul.mubr.f32.gmra.mrb[0].mxu0 %v364
  %v683 = vpop.f32.mrb[0].mxu0
  %v684 = vadd.f32 %v310, %v683
  %v685 = vpop.f32.mrb[0].mxu0
  %686 = vmatprep.mubr.f32.mxu0 0.0
  %687 = vmatmul.mubr.f32.gmra.mrb[0].mxu0 %v367
  %v688 = vpop.f32.mrb[0].mxu0
  %v689 = vadd.f32 %v311, %v688
  %v690 = vpop.f32.mrb[0].mxu0
  %691 = vmatprep.mubr.f32.mxu0 0.0
  %692 = vmatmul.mubr.f32.gmra.mrb[0].mxu0 %v370
  %v693 = vpop.f32.mrb[0].mxu0
  %v694 = vadd.f32 %v312, %v693
  %v695 = vpop.f32.mrb[0].mxu0
  %696 = vmatprep.mubr.f32.mxu0 0.0
  %697 = vmatmul.mubr.f32.gmra.mrb[0].mxu0 %v373
  %v698 = vpop.f32.mrb[0].mxu0
  %v699 = vadd.f32 %v313, %v698
  %v700 = vpop.f32.mrb[0].mxu0
  %701 = vmatprep.mubr.f32.mxu0 0.0
  %702 = vmatmul.mubr.f32.gmra.mrb[0].mxu0 %v376
  %v703 = vpop.f32.mrb[0].mxu0
  %v704 = vadd.f32 %v314, %v703
  %v705 = vpop.f32.mrb[0].mxu0
  %706 = vmatprep.mubr.f32.mxu0 0.0
  %707 = vmatmul.mubr.f32.gmra.mrb[0].mxu0 %v379
  %v708 = vpop.f32.mrb[0].mxu0
  %v709 = vadd.f32 %v315, %v708
  %v710 = vpop.f32.mrb[0].mxu0
  %711 = vdwg.mxu0
  %v712 = vtanh.pop %v674
  %v713 = vtanh.pop %v679
  %v714 = vtanh.pop %v684
  %v715 = vtanh.pop %v689
  %v716 = vtanh.pop %v694
  %v717 = vtanh.pop %v699
  %v718 = vtanh.pop %v704
  %v719 = vtanh.pop %v709
  %720 = vmatprep.subr.mxu0 0.0
  %721 = vmatpush1.msra.mxu0 %v712
  %722 = vmatprep.subr.mxu0 0.0
  %723 = vmatpush1.msra.mxu0 %v713
  %724 = vmatprep.subr.mxu0 0.0
  %725 = vmatpush1.msra.mxu0 %v714
  %726 = vmatprep.subr.mxu0 0.0
  %727 = vmatpush1.msra.mxu0 %v715
  %728 = vmatprep.subr.mxu0 0.0
  %729 = vmatpush1.msra.mxu0 %v716
  %730 = vmatprep.subr.mxu0 0.0
  %731 = vmatpush1.msra.mxu0 %v717
  %732 = vmatprep.subr.mxu0 0.0
  %733 = vmatpush1.msra.mxu0 %v718
  %734 = vmatprep.subr.mxu0 0.0
  %735 = vmatpush1.msra.mxu0 %v719
  %736 = vmatprep.subr.mxu0 0.0
  %737 = vmatpush1.msra.mxu0 0.0
  %738 = vmatprep.subr.mxu0 0.0
  %739 = vmatpush1.msra.mxu0 0.0
  %740 = vmatprep.subr.mxu0 0.0
  %741 = vmatpush1.msra.mxu0 0.0
  %742 = vmatprep.subr.mxu0 0.0
  %743 = vmatpush1.msra.mxu0 0.0
  %744 = vmatprep.subr.mxu0 0.0
  %745 = vmatpush1.msra.mxu0 0.0
  %746 = vmatprep.subr.mxu0 0.0
  %747 = vmatpush1.msra.mxu0 0.0
  %748 = vmatprep.subr.mxu0 0.0
  %749 = vmatpush1.msra.mxu0 0.0
  %750 = vmatprep.subr.mxu0 0.0
  %751 = vmatpush1.msra.mxu0 0.0
  %752 = vmatprep.subr.mxu0 0.0
  %753 = vmatpush1.msra.mxu0 0.0
  %754 = vmatprep.subr.mxu0 0.0
  %755 = vmatpush1.msra.mxu0 0.0
  %756 = vmatprep.subr.mxu0 0.0
  %757 = vmatpush1.msra.mxu0 0.0
  %758 = vmatprep.subr.mxu0 0.0
  %759 = vmatpush1.msra.mxu0 0.0
  %760 = vmatprep.subr.mxu0 0.0
  %761 = vmatpush1.msra.mxu0 0.0
  %762 = vmatprep.subr.mxu0 0.0
  %763 = vmatpush1.msra.mxu0 0.0
  %764 = vmatprep.subr.mxu0 0.0
  %765 = vmatpush1.msra.mxu0 0.0
  %766 = vmatprep.subr.mxu0 0.0
  %767 = vmatpush1.msra.mxu0 0.0
  %768 = vmatprep.subr.mxu0 0.0
  %769 = vmatpush1.msra.mxu0 0.0
  %770 = vmatprep.subr.mxu0 0.0
  %771 = vmatpush1.msra.mxu0 0.0
  %772 = vmatprep.subr.mxu0 0.0
  %773 = vmatpush1.msra.mxu0 0.0
  %774 = vmatprep.subr.mxu0 0.0
  %775 = vmatpush1.msra.mxu0 0.0
  %776 = vmatprep.subr.mxu0 0.0
  %777 = vmatpush1.msra.mxu0 0.0
  %778 = vmatprep.subr.mxu0 0.0
  %779 = vmatpush1.msra.mxu0 0.0
  %780 = vmatprep.subr.mxu0 0.0
  %781 = vmatpush1.msra.mxu0 0.0
  %782 = vmatprep.subr.mxu0 0.0
  %783 = vmatpush1.msra.mxu0 0.0
  %784 = vmatprep.mubr.f32.mxu0 0.0
  %785 = vmatmul.mubr.f32.gmra.mrb[0].mxu0 %v358
  %v786 = vpop.f32.mrb[0].mxu0
  %v787 = vadd.f32 %v316, %v786
  %v788 = vpop.f32.mrb[0].mxu0
  %789 = vmatprep.mubr.f32.mxu0 0.0
  %790 = vmatmul.mubr.f32.gmra.mrb[0].mxu0 %v361
  %v791 = vpop.f32.mrb[0].mxu0
  %v792 = vadd.f32 %v317, %v791
  %v793 = vpop.f32.mrb[0].mxu0
  %794 = vmatprep.mubr.f32.mxu0 0.0
  %795 = vmatmul.mubr.f32.gmra.mrb[0].mxu0 %v364
  %v796 = vpop.f32.mrb[0].mxu0
  %v797 = vadd.f32 %v318, %v796
  %v798 = vpop.f32.mrb[0].mxu0
  %799 = vmatprep.mubr.f32.mxu0 0.0
  %800 = vmatmul.mubr.f32.gmra.mrb[0].mxu0 %v367
  %v801 = vpop.f32.mrb[0].mxu0
  %v802 = vadd.f32 %v319, %v801
  %v803 = vpop.f32.mrb[0].mxu0
  %804 = vmatprep.mubr.f32.mxu0 0.0
  %805 = vmatmul.mubr.f32.gmra.mrb[0].mxu0 %v370
  %v806 = vpop.f32.mrb[0].mxu0
  %v807 = vadd.f32 %v320, %v806
  %v808 = vpop.f32.mrb[0].mxu0
  %809 = vmatprep.mubr.f32.mxu0 0.0
  %810 = vmatmul.mubr.f32.gmra.mrb[0].mxu0 %v373
  %v811 = vpop.f32.mrb[0].mxu0
  %v812 = vadd.f32 %v321, %v811
  %v813 = vpop.f32.mrb[0].mxu0
  %814 = vmatprep.mubr.f32.mxu0 0.0
  %815 = vmatmul.mubr.f32.gmra.mrb[0].mxu0 %v376
  %v816 = vpop.f32.mrb[0].mxu0
  %v817 = vadd.f32 %v322, %v816
  %v818 = vpop.f32.mrb[0].mxu0
  %819 = vmatprep.mubr.f32.mxu0 0.0
  %820 = vmatmul.mubr.f32.gmra.mrb[0].mxu0 %v379
  %v821 = vpop.f32.mrb[0].mxu0
  %v822 = vadd.f32 %v323, %v821
  %v823 = vpop.f32.mrb[0].mxu0
  %824 = vdwg.mxu0
  %v825 = vtanh.pop %v787
  %v826 = vtanh.pop %v792
  %v827 = vtanh.pop %v797
  %v828 = vtanh.pop %v802
  %v829 = vtanh.pop %v807
  %v830 = vtanh.pop %v812
  %v831 = vtanh.pop %v817
  %v832 = vtanh.pop %v822
  %833 = vmatprep.subr.mxu0 0.0
  %834 = vmatpush1.msra.mxu0 %v825
  %835 = vmatprep.subr.mxu0 0.0
  %836 = vmatpush1.msra.mxu0 %v826
  %837 = vmatprep.subr.mxu0 0.0
  %838 = vmatpush1.msra.mxu0 %v827
  %839 = vmatprep.subr.mxu0 0.0
  %840 = vmatpush1.msra.mxu0 %v828
  %841 = vmatprep.subr.mxu0 0.0
  %842 = vmatpush1.msra.mxu0 %v829
  %843 = vmatprep.subr.mxu0 0.0
  %844 = vmatpush1.msra.mxu0 %v830
  %845 = vmatprep.subr.mxu0 0.0
  %846 = vmatpush1.msra.mxu0 %v831
  %847 = vmatprep.subr.mxu0 0.0
  %848 = vmatpush1.msra.mxu0 %v832
  %849 = vmatprep.subr.mxu0 0.0
  %850 = vmatpush1.msra.mxu0 0.0
  %851 = vmatprep.subr.mxu0 0.0
  %852 = vmatpush1.msra.mxu0 0.0
  %853 = vmatprep.subr.mxu0 0.0
  %854 = vmatpush1.msra.mxu0 0.0
  %855 = vmatprep.subr.mxu0 0.0
  %856 = vmatpush1.msra.mxu0 0.0
  %857 = vmatprep.subr.mxu0 0.0
  %858 = vmatpush1.msra.mxu0 0.0
  %859 = vmatprep.subr.mxu0 0.0
  %860 = vmatpush1.msra.mxu0 0.0
  %861 = vmatprep.subr.mxu0 0.0
  %862 = vmatpush1.msra.mxu0 0.0
  %863 = vmatprep.subr.mxu0 0.0
  %864 = vmatpush1.msra.mxu0 0.0
  %865 = vmatprep.subr.mxu0 0.0
  %866 = vmatpush1.msra.mxu0 0.0
  %867 = vmatprep.subr.mxu0 0.0
  %868 = vmatpush1.msra.mxu0 0.0
  %869 = vmatprep.subr.mxu0 0.0
  %870 = vmatpush1.msra.mxu0 0.0
  %871 = vmatprep.subr.mxu0 0.0
  %872 = vmatpush1.msra.mxu0 0.0
  %873 = vmatprep.subr.mxu0 0.0
  %874 = vmatpush1.msra.mxu0 0.0
  %875 = vmatprep.subr.mxu0 0.0
  %876 = vmatpush1.msra.mxu0 0.0
  %877 = vmatprep.subr.mxu0 0.0
  %878 = vmatpush1.msra.mxu0 0.0
  %879 = vmatprep.subr.mxu0 0.0
  %880 = vmatpush1.msra.mxu0 0.0
  %881 = vmatprep.subr.mxu0 0.0
  %882 = vmatpush1.msra.mxu0 0.0
  %883 = vmatprep.subr.mxu0 0.0
  %884 = vmatpush1.msra.mxu0 0.0
  %885 = vmatprep.subr.mxu0 0.0
  %886 = vmatpush1.msra.mxu0 0.0
  %887 = vmatprep.subr.mxu0 0.0
  %888 = vmatpush1.msra.mxu0 0.0
  %889 = vmatprep.subr.mxu0 0.0
  %890 = vmatpush1.msra.mxu0 0.0
  %891 = vmatprep.subr.mxu0 0.0
  %892 = vmatpush1.msra.mxu0 0.0
  %893 = vmatprep.subr.mxu0 0.0
  %894 = vmatpush1.msra.mxu0 0.0
  %895 = vmatprep.subr.mxu0 0.0
  %896 = vmatpush1.msra.mxu0 0.0
  %897 = vmatprep.mubr.f32.mxu0 0.0
  %898 = vmatmul.mubr.f32.gmra.mrb[0].mxu0 %v358
  %v899 = vpop.f32.mrb[0].mxu0
  %v900 = vadd.f32 %v324, %v899
  %v901 = vpop.f32.mrb[0].mxu0
  %902 = vmatprep.mubr.f32.mxu0 0.0
  %903 = vmatmul.mubr.f32.gmra.mrb[0].mxu0 %v361
  %v904 = vpop.f32.mrb[0].mxu0
  %v905 = vadd.f32 %v325, %v904
  %v906 = vpop.f32.mrb[0].mxu0
  %907 = vmatprep.mubr.f32.mxu0 0.0
  %908 = vmatmul.mubr.f32.gmra.mrb[0].mxu0 %v364
  %v909 = vpop.f32.mrb[0].mxu0
  %v910 = vadd.f32 %v326, %v909
  %v911 = vpop.f32.mrb[0].mxu0
  %912 = vmatprep.mubr.f32.mxu0 0.0
  %913 = vmatmul.mubr.f32.gmra.mrb[0].mxu0 %v367
  %v914 = vpop.f32.mrb[0].mxu0
  %v915 = vadd.f32 %v327, %v914
  %v916 = vpop.f32.mrb[0].mxu0
  %917 = vmatprep.mubr.f32.mxu0 0.0
  %918 = vmatmul.mubr.f32.gmra.mrb[0].mxu0 %v370
  %v919 = vpop.f32.mrb[0].mxu0
  %v920 = vadd.f32 %v328, %v919
  %v921 = vpop.f32.mrb[0].mxu0
  %922 = vmatprep.mubr.f32.mxu0 0.0
  %923 = vmatmul.mubr.f32.gmra.mrb[0].mxu0 %v373
  %v924 = vpop.f32.mrb[0].mxu0
  %v925 = vadd.f32 %v329, %v924
  %v926 = vpop.f32.mrb[0].mxu0
  %927 = vmatprep.mubr.f32.mxu0 0.0
  %928 = vmatmul.mubr.f32.gmra.mrb[0].mxu0 %v376
  %v929 = vpop.f32.mrb[0].mxu0
  %v930 = vadd.f32 %v330, %v929
  %v931 = vpop.f32.mrb[0].mxu0
  %932 = vmatprep.mubr.f32.mxu0 0.0
  %933 = vmatmul.mubr.f32.gmra.mrb[0].mxu0 %v379
  %v934 = vpop.f32.mrb[0].mxu0
  %v935 = vadd.f32 %v331, %v934
  %v936 = vpop.f32.mrb[0].mxu0
  %937 = vdwg.mxu0
  %v938 = vtanh.pop %v900
  %v939 = vtanh.pop %v905
  %v940 = vtanh.pop %v910
  %v941 = vtanh.pop %v915
  %v942 = vtanh.pop %v920
  %v943 = vtanh.pop %v925
  %v944 = vtanh.pop %v930
  %v945 = vtanh.pop %v935
  %946 = vmatprep.subr.mxu0 0.0
  %947 = vmatpush1.msra.mxu0 %v938
  %948 = vmatprep.subr.mxu0 0.0
  %949 = vmatpush1.msra.mxu0 %v939
  %950 = vmatprep.subr.mxu0 0.0
  %951 = vmatpush1.msra.mxu0 %v940
  %952 = vmatprep.subr.mxu0 0.0
  %953 = vmatpush1.msra.mxu0 %v941
  %954 = vmatprep.subr.mxu0 0.0
  %955 = vmatpush1.msra.mxu0 %v942
  %956 = vmatprep.subr.mxu0 0.0
  %957 = vmatpush1.msra.mxu0 %v943
  %958 = vmatprep.subr.mxu0 0.0
  %959 = vmatpush1.msra.mxu0 %v944
  %960 = vmatprep.subr.mxu0 0.0
  %961 = vmatpush1.msra.mxu0 %v945
  %962 = vmatprep.subr.mxu0 0.0
  %963 = vmatpush1.msra.mxu0 0.0
  %964 = vmatprep.subr.mxu0 0.0
  %965 = vmatpush1.msra.mxu0 0.0
  %966 = vmatprep.subr.mxu0 0.0
  %967 = vmatpush1.msra.mxu0 0.0
  %968 = vmatprep.subr.mxu0 0.0
  %969 = vmatpush1.msra.mxu0 0.0
  %970 = vmatprep.subr.mxu0 0.0
  %971 = vmatpush1.msra.mxu0 0.0
  %972 = vmatprep.subr.mxu0 0.0
  %973 = vmatpush1.msra.mxu0 0.0
  %974 = vmatprep.subr.mxu0 0.0
  %975 = vmatpush1.msra.mxu0 0.0
  %976 = vmatprep.subr.mxu0 0.0
  %977 = vmatpush1.msra.mxu0 0.0
  %978 = vmatprep.subr.mxu0 0.0
  %979 = vmatpush1.msra.mxu0 0.0
  %980 = vmatprep.subr.mxu0 0.0
  %981 = vmatpush1.msra.mxu0 0.0
  %982 = vmatprep.subr.mxu0 0.0
  %983 = vmatpush1.msra.mxu0 0.0
  %984 = vmatprep.subr.mxu0 0.0
  %985 = vmatpush1.msra.mxu0 0.0
  %986 = vmatprep.subr.mxu0 0.0
  %987 = vmatpush1.msra.mxu0 0.0
  %988 = vmatprep.subr.mxu0 0.0
  %989 = vmatpush1.msra.mxu0 0.0
  %990 = vmatprep.subr.mxu0 0.0
  %991 = vmatpush1.msra.mxu0 0.0
  %992 = vmatprep.subr.mxu0 0.0
  %993 = vmatpush1.msra.mxu0 0.0
  %994 = vmatprep.subr.mxu0 0.0
  %995 = vmatpush1.msra.mxu0 0.0
  %996 = vmatprep.subr.mxu0 0.0
  %997 = vmatpush1.msra.mxu0 0.0
  %998 = vmatprep.subr.mxu0 0.0
  %999 = vmatpush1.msra.mxu0 0.0
  %1000 = vmatprep.subr.mxu0 0.0
  %1001 = vmatpush1.msra.mxu0 0.0
  %1002 = vmatprep.subr.mxu0 0.0
  %1003 = vmatpush1.msra.mxu0 0.0
  %1004 = vmatprep.subr.mxu0 0.0
  %1005 = vmatpush1.msra.mxu0 0.0
  %1006 = vmatprep.subr.mxu0 0.0
  %1007 = vmatpush1.msra.mxu0 0.0
  %1008 = vmatprep.subr.mxu0 0.0
  %1009 = vmatpush1.msra.mxu0 0.0
  %1010 = vmatprep.mubr.f32.mxu0 0.0
  %1011 = vmatmul.mubr.f32.gmra.mrb[0].mxu0 %v358
  %v1012 = vpop.f32.mrb[0].mxu0
  %v1013 = vadd.f32 %v332, %v1012
  %v1014 = vpop.f32.mrb[0].mxu0
  %1015 = vmatprep.mubr.f32.mxu0 0.0
  %1016 = vmatmul.mubr.f32.gmra.mrb[0].mxu0 %v361
  %v1017 = vpop.f32.mrb[0].mxu0
  %v1018 = vadd.f32 %v333, %v1017
  %v1019 = vpop.f32.mrb[0].mxu0
  %1020 = vmatprep.mubr.f32.mxu0 0.0
  %1021 = vmatmul.mubr.f32.gmra.mrb[0].mxu0 %v364
  %v1022 = vpop.f32.mrb[0].mxu0
  %v1023 = vadd.f32 %v334, %v1022
  %v1024 = vpop.f32.mrb[0].mxu0
  %1025 = vmatprep.mubr.f32.mxu0 0.0
  %1026 = vmatmul.mubr.f32.gmra.mrb[0].mxu0 %v367
  %v1027 = vpop.f32.mrb[0].mxu0
  %v1028 = vadd.f32 %v335, %v1027
  %v1029 = vpop.f32.mrb[0].mxu0
  %1030 = vmatprep.mubr.f32.mxu0 0.0
  %1031 = vmatmul.mubr.f32.gmra.mrb[0].mxu0 %v370
  %v1032 = vpop.f32.mrb[0].mxu0
  %v1033 = vadd.f32 %v336, %v1032
  %v1034 = vpop.f32.mrb[0].mxu0
  %1035 = vmatprep.mubr.f32.mxu0 0.0
  %1036 = vmatmul.mubr.f32.gmra.mrb[0].mxu0 %v373
  %v1037 = vpop.f32.mrb[0].mxu0
  %v1038 = vadd.f32 %v337, %v1037
  %v1039 = vpop.f32.mrb[0].mxu0
  %1040 = vmatprep.mubr.f32.mxu0 0.0
  %1041 = vmatmul.mubr.f32.gmra.mrb[0].mxu0 %v376
  %v1042 = vpop.f32.mrb[0].mxu0
  %v1043 = vadd.f32 %v338, %v1042
  %v1044 = vpop.f32.mrb[0].mxu0
  %1045 = vmatprep.mubr.f32.mxu0 0.0
  %1046 = vmatmul.mubr.f32.gmra.mrb[0].mxu0 %v379
  %v1047 = vpop.f32.mrb[0].mxu0
  %v1048 = vadd.f32 %v339, %v1047
  %v1049 = vpop.f32.mrb[0].mxu0
  %1050 = vdwg.mxu0
  %v1051 = vtanh.pop %v1013
  %v1052 = vtanh.pop %v1018
  %v1053 = vtanh.pop %v1023
  %v1054 = vtanh.pop %v1028
  %v1055 = vtanh.pop %v1033
  %v1056 = vtanh.pop %v1038
  %v1057 = vtanh.pop %v1043
  %v1058 = vtanh.pop %v1048
  %1059 = vmatprep.subr.mxu0 0.0
  %1060 = vmatpush1.msra.mxu0 %v1051
  %1061 = vmatprep.subr.mxu0 0.0
  %1062 = vmatpush1.msra.mxu0 %v1052
  %1063 = vmatprep.subr.mxu0 0.0
  %1064 = vmatpush1.msra.mxu0 %v1053
  %1065 = vmatprep.subr.mxu0 0.0
  %1066 = vmatpush1.msra.mxu0 %v1054
  %1067 = vmatprep.subr.mxu0 0.0
  %1068 = vmatpush1.msra.mxu0 %v1055
  %1069 = vmatprep.subr.mxu0 0.0
  %1070 = vmatpush1.msra.mxu0 %v1056
  %1071 = vmatprep.subr.mxu0 0.0
  %1072 = vmatpush1.msra.mxu0 %v1057
  %1073 = vmatprep.subr.mxu0 0.0
  %1074 = vmatpush1.msra.mxu0 %v1058
  %1075 = vmatprep.subr.mxu0 0.0
  %1076 = vmatpush1.msra.mxu0 0.0
  %1077 = vmatprep.subr.mxu0 0.0
  %1078 = vmatpush1.msra.mxu0 0.0
  %1079 = vmatprep.subr.mxu0 0.0
  %1080 = vmatpush1.msra.mxu0 0.0
  %1081 = vmatprep.subr.mxu0 0.0
  %1082 = vmatpush1.msra.mxu0 0.0
  %1083 = vmatprep.subr.mxu0 0.0
  %1084 = vmatpush1.msra.mxu0 0.0
  %1085 = vmatprep.subr.mxu0 0.0
  %1086 = vmatpush1.msra.mxu0 0.0
  %1087 = vmatprep.subr.mxu0 0.0
  %1088 = vmatpush1.msra.mxu0 0.0
  %1089 = vmatprep.subr.mxu0 0.0
  %1090 = vmatpush1.msra.mxu0 0.0
  %1091 = vmatprep.subr.mxu0 0.0
  %1092 = vmatpush1.msra.mxu0 0.0
  %1093 = vmatprep.subr.mxu0 0.0
  %1094 = vmatpush1.msra.mxu0 0.0
  %1095 = vmatprep.subr.mxu0 0.0
  %1096 = vmatpush1.msra.mxu0 0.0
  %1097 = vmatprep.subr.mxu0 0.0
  %1098 = vmatpush1.msra.mxu0 0.0
  %1099 = vmatprep.subr.mxu0 0.0
  %1100 = vmatpush1.msra.mxu0 0.0
  %1101 = vmatprep.subr.mxu0 0.0
  %1102 = vmatpush1.msra.mxu0 0.0
  %1103 = vmatprep.subr.mxu0 0.0
  %1104 = vmatpush1.msra.mxu0 0.0
  %1105 = vmatprep.subr.mxu0 0.0
  %1106 = vmatpush1.msra.mxu0 0.0
  %1107 = vmatprep.subr.mxu0 0.0
  %1108 = vmatpush1.msra.mxu0 0.0
  %1109 = vmatprep.subr.mxu0 0.0
  %1110 = vmatpush1.msra.mxu0 0.0
  %1111 = vmatprep.subr.mxu0 0.0
  %1112 = vmatpush1.msra.mxu0 0.0
  %1113 = vmatprep.subr.mxu0 0.0
  %1114 = vmatpush1.msra.mxu0 0.0
  %1115 = vmatprep.subr.mxu0 0.0
  %1116 = vmatpush1.msra.mxu0 0.0
  %1117 = vmatprep.subr.mxu0 0.0
  %1118 = vmatpush1.msra.mxu0 0.0
  %1119 = vmatprep.subr.mxu0 0.0
  %1120 = vmatpush1.msra.mxu0 0.0
  %1121 = vmatprep.subr.mxu0 0.0
  %1122 = vmatpush1.msra.mxu0 0.0
  %1123 = vmatprep.mubr.f32.mxu0 0.0
  %1124 = vmatmul.mubr.f32.gmra.mrb[0].mxu0 %v358
  %v1125 = vpop.f32.mrb[0].mxu0
  %v1126 = vadd.f32 %v340, %v1125
  %v1127 = vpop.f32.mrb[0].mxu0
  %1128 = vmatprep.mubr.f32.mxu0 0.0
  %1129 = vmatmul.mubr.f32.gmra.mrb[0].mxu0 %v361
  %v1130 = vpop.f32.mrb[0].mxu0
  %v1131 = vadd.f32 %v341, %v1130
  %v1132 = vpop.f32.mrb[0].mxu0
  %1133 = vmatprep.mubr.f32.mxu0 0.0
  %1134 = vmatmul.mubr.f32.gmra.mrb[0].mxu0 %v364
  %v1135 = vpop.f32.mrb[0].mxu0
  %v1136 = vadd.f32 %v342, %v1135
  %v1137 = vpop.f32.mrb[0].mxu0
  %1138 = vmatprep.mubr.f32.mxu0 0.0
  %1139 = vmatmul.mubr.f32.gmra.mrb[0].mxu0 %v367
  %v1140 = vpop.f32.mrb[0].mxu0
  %v1141 = vadd.f32 %v343, %v1140
  %v1142 = vpop.f32.mrb[0].mxu0
  %1143 = vmatprep.mubr.f32.mxu0 0.0
  %1144 = vmatmul.mubr.f32.gmra.mrb[0].mxu0 %v370
  %v1145 = vpop.f32.mrb[0].mxu0
  %v1146 = vadd.f32 %v344, %v1145
  %v1147 = vpop.f32.mrb[0].mxu0
  %1148 = vmatprep.mubr.f32.mxu0 0.0
  %1149 = vmatmul.mubr.f32.gmra.mrb[0].mxu0 %v373
  %v1150 = vpop.f32.mrb[0].mxu0
  %v1151 = vadd.f32 %v345, %v1150
  %v1152 = vpop.f32.mrb[0].mxu0
  %1153 = vmatprep.mubr.f32.mxu0 0.0
  %1154 = vmatmul.mubr.f32.gmra.mrb[0].mxu0 %v376
  %v1155 = vpop.f32.mrb[0].mxu0
  %v1156 = vadd.f32 %v346, %v1155
  %v1157 = vpop.f32.mrb[0].mxu0
  %1158 = vmatprep.mubr.f32.mxu0 0.0
  %1159 = vmatmul.mubr.f32.gmra.mrb[0].mxu0 %v379
  %v1160 = vpop.f32.mrb[0].mxu0
  %v1161 = vadd.f32 %v347, %v1160
  %v1162 = vpop.f32.mrb[0].mxu0
  %1163 = vdwg.mxu0
  %v1164 = vtanh.pop %v1126
  %v1165 = vtanh.pop %v1131
  %v1166 = vtanh.pop %v1136
  %v1167 = vtanh.pop %v1141
  %v1168 = vtanh.pop %v1146
  %v1169 = vtanh.pop %v1151
  %v1170 = vtanh.pop %v1156
  %v1171 = vtanh.pop %v1161
  %v1172 = vld [vmem:[%s4] sm:$0xff]
  %v1173 = vld [vmem:[%s4 + $0x8] sm:$0xff]
  %v1174 = vld [vmem:[%s4 + $0x10] sm:$0xff]
  %v1175 = vld [vmem:[%s4 + $0x18] sm:$0xff]
  %v1176 = vld [vmem:[%s4 + $0x20] sm:$0xff]
  %v1177 = vld [vmem:[%s4 + $0x28] sm:$0xff]
  %v1178 = vld [vmem:[%s4 + $0x30] sm:$0xff]
  %v1179 = vld [vmem:[%s4 + $0x38] sm:$0xff]
  %1181 = vset.pattern.permute.xlu0 0
  %1182 = vperm.xlu0 %1181, %v1172
  %v1183 = vpop.permute.xlu0 %1182
  %1186 = vset.pattern.permute.xlu0 0
  %1187 = vperm.xlu0 %1186, %v1173
  %v1188 = vpop.permute.xlu0 %1187
  %1191 = vset.pattern.permute.xlu0 0
  %1192 = vperm.xlu0 %1191, %v1174
  %v1193 = vpop.permute.xlu0 %1192
  %1196 = vset.pattern.permute.xlu0 0
  %1197 = vperm.xlu0 %1196, %v1175
  %v1198 = vpop.permute.xlu0 %1197
  %1201 = vset.pattern.permute.xlu0 0
  %1202 = vperm.xlu0 %1201, %v1176
  %v1203 = vpop.permute.xlu0 %1202
  %1206 = vset.pattern.permute.xlu0 0
  %1207 = vperm.xlu0 %1206, %v1177
  %v1208 = vpop.permute.xlu0 %1207
  %1211 = vset.pattern.permute.xlu0 0
  %1212 = vperm.xlu0 %1211, %v1178
  %v1213 = vpop.permute.xlu0 %1212
  %1216 = vset.pattern.permute.xlu0 0
  %1217 = vperm.xlu0 %1216, %v1179
  %v1218 = vpop.permute.xlu0 %1217
  %v1220 = vmul.f32 %v1164, %v1183
  %v1221 = vmul.f32 %v1165, %v1188
  %v1222 = vmul.f32 %v1166, %v1193
  %v1223 = vmul.f32 %v1167, %v1198
  %v1224 = vmul.f32 %v1168, %v1203
  %v1225 = vmul.f32 %v1169, %v1208
  %v1226 = vmul.f32 %v1170, %v1213
  %v1227 = vmul.f32 %v1171, %v1218
  %v1228 = vadd.f32 %v1220, %v1221
  %v1229 = vadd.f32 %v1228, %v1222
  %v1230 = vadd.f32 %v1229, %v1223
  %v1231 = vadd.f32 %v1230, %v1224
  %v1232 = vadd.f32 %v1231, %v1225
  %v1233 = vadd.f32 %v1232, %v1226
  %v1234 = vadd.f32 %v1233, %v1227
  %v1235 = vrot.slane %v1234, 4
  %v1236 = vadd.f32 %v1234, %v1235
  %v1237 = vrot.slane %v1236, 2
  %v1238 = vadd.f32 %v1236, %v1237
  %v1239 = vrot.slane %v1238, 1
  %v1240 = vadd.f32 %v1238, %v1239
  %v1241 = vld [vmem:[#allocation2] sm:$0x1]
  %1243 = vset.pattern.permute.xlu0 0
  %1244 = vperm.xlu0 %1243, %v1241
  %v1245 = vpop.permute.xlu0 %1244
  %v1247 = vlaneseq
  %v1248 = vshrl.u32 %v1247, 7
  %v1249 = vsub.s32 0, %v1248
  %v1250 = vrot.slane %v1245, %v1249
  %v1251 = vadd.f32 %v1240, %v1250
  %v1252 = vxor.u32 %v1251, 2147483648
  %v1253 = vmul.f32 %v1252, 1.442695
  %v1254 = vpow.pop %v1253
  %v1255 = vadd.f32 %v1254, 1.0
  %v1256 = vrcp.pop %v1255
  %v1257 = vmul.f32 1.0, %v1256
  %1258 = vst [vmem:[%s6] sm:$0x1] %v1257
  // Predicated region
  $region26: #{rnn_classifier_forward.1} parent=0 // pred_check
    _
  $region27: #{rnn_classifier_forward.1} parent=0 // pred_check_branch
    %1260 = sbr.rel (0) target = $region29
  $region28: #{rnn_classifier_forward.1} parent=0 // pred_region
    _
  $region29: #{rnn_classifier_forward.1} parent=0 // pred_fallthru
    _
  // Predicated region
  $region30: #{rnn_classifier_forward.1} parent=0 // pred_check
    _
  $region31: #{rnn_classifier_forward.1} parent=0 // pred_check_branch
    %1262 = sbr.rel (0) target = $region33
  $region32: #{rnn_classifier_forward.1} parent=0 // pred_region
    _
  $region33: #{rnn_classifier_forward.1} parent=0 // pred_fallthru
    _

</llo_original>
